<compile_context>
chip_gen: v5e
topology: v5e:2x2
jax: 0.10.0
libtpu: 0.0.40
codegen_flags: <defaults>
</compile_context>

<pallas_src>
import jax
import jax.numpy as jnp
from jax.experimental import pallas as pl
from jax.experimental.pallas import tpu as pltpu

# ----------------------------- model sizes ---------------------------------
V = 64     # vocabulary size (real columns)
VP = 128   # lane-padded vocab width used inside the kernel (full 128-lane stores)
H = 32     # hidden size
B = 2      # batch
S = 8      # title / draft sequence length
T = 8      # target (decoded) sequence length


# ----------------------------- fused Pallas kernel --------------------------
def _fused_kernel(ids_ref, rowmask_ref, emb_ref, wenc_ref, benc_ref,
                  wq_ref, wctx_ref, bcomb_ref, wout_ref, bout_ref, out_ref):
    """Fused forward: 1 embedding matmul + 1 encoder matmul + fused 3-stream
    attention + combination + vocab log_softmax.

    ids_ref     : (R, 1)      int32  R = 3*B*S + B*T, rows ordered
                                     [title | prev_title | prev_draft | target]
    rowmask_ref : (3*B*S, 1)  f32    per-row stream-validity mask (0 => zeros)
    emb_ref     : (V, H)      bf16   embedding table
    wenc_ref    : (H, H)      bf16 ; benc_ref  : (1, H)  f32
    wq_ref      : (H, H)      bf16   decoder-input projection
    wctx_ref    : (3, H, H)   bf16   per-stream context projections W1/W2/W3
    bcomb_ref   : (1, H)      f32
    wout_ref    : (H, VP)     bf16 ; bout_ref  : (1, VP) f32 (pad cols = -1e30)
    out_ref     : (B, T, VP)  f32    log_softmax logits (pad cols are junk)
    """
    f32, bf16 = jnp.float32, jnp.bfloat16
    R = ids_ref.shape[0]
    Vv, Hh = emb_ref.shape
    Bb, Tt, Vp = out_ref.shape
    n_enc = rowmask_ref.shape[0]              # 3*B*S
    Ss = n_enc // (3 * Bb)

    # ---- (1) ONE embedding lookup for all four streams (one-hot @ table) ---
    ids = ids_ref[...]                                              # (R, 1)
    iota = jax.lax.broadcasted_iota(jnp.int32, (R, Vv), 1)
    oh = (ids == iota).astype(bf16)                                 # exact 0/1
    emb_all = jnp.dot(oh, emb_ref[...], preferred_element_type=f32)  # (R, H)

    enc_in = emb_all[:n_enc]                                        # (3BS, H)
    q2 = emb_all[n_enc:]                                            # (BT, H)

    # ---- (2) shared encoder stand-in, all 3 streams in one matmul + mask ---
    enc = jnp.tanh(
        jnp.dot(enc_in.astype(bf16), wenc_ref[...], preferred_element_type=f32)
        + benc_ref[...]) * rowmask_ref[...]                         # (3BS, H)
    enc_bf = enc.astype(bf16)

    # title "encoder hidden" = mean over seq of the title stream
    hidden = jnp.mean(enc[:Bb * Ss].reshape(Bb, Ss, Hh),
                      axis=1, keepdims=True)                        # (B, 1, H)

    # ---- (3) fused 3-stream dot attention (streams folded into batch) ------
    q_bf = q2.astype(bf16).reshape(Bb, Tt, Hh)                      # queries
    q_g = jnp.concatenate([q_bf, q_bf, q_bf], axis=0)               # (3B, T, H)
    enc_g = enc_bf.reshape(3 * Bb, Ss, Hh)                          # keys

    s = jnp.einsum('gtd,gsd->gts', q_g, enc_g,
                   preferred_element_type=f32)                      # (3B, T, S)
    s = s - jnp.max(s, axis=-1, keepdims=True)
    p = jnp.exp(s)
    p = p * pl.reciprocal(jnp.sum(p, axis=-1, keepdims=True), approx=True)

    # per-stream value projection (W1/W2/W3) as ONE batched matmul; it is off
    # the softmax critical path and makes the later 4-way sum a single add.
    encv = jnp.einsum('nrd,ndh->nrh', enc_bf.reshape(3, Bb * Ss, Hh),
                      wctx_ref[...], preferred_element_type=f32)    # (3, BS, H)
    encv_g = encv.astype(bf16).reshape(3 * Bb, Ss, Hh)              # values
    ctx_g = jnp.einsum('gts,gsd->gtd', p.astype(bf16), encv_g,
                       preferred_element_type=f32)                  # (3B, T, H)
    ctx = ctx_g[:Bb] + ctx_g[Bb:2 * Bb] + ctx_g[2 * Bb:]            # (B, T, H)

    # ---- (4) combination: ctx already carries W1/W2/W3 ---------------------
    qproj = jnp.dot(q2.astype(bf16), wq_ref[...],
                    preferred_element_type=f32).reshape(Bb, Tt, Hh)
    comb = jnp.tanh(ctx + qproj + hidden + bcomb_ref[...])          # (B, T, H)

    # ---- (5) vocab projection + exact log_softmax (lane-dense 128 cols) ----
    logits = jnp.dot(comb.reshape(Bb * Tt, Hh).astype(bf16), wout_ref[...],
                     preferred_element_type=f32) + bout_ref[...]    # (BT, VP)
    m = jnp.max(logits, axis=-1, keepdims=True)
    lse = m + jnp.log(jnp.sum(jnp.exp(logits - m), axis=-1, keepdims=True))
    out_ref[...] = (logits - lse).reshape(Bb, Tt, Vp).astype(out_ref.dtype)


# ----------------------------- pallas_call wrapper ---------------------------
def fb_seq2seq_forward(ids_flat, rowmask, bt_shape, p):
    """ids_flat (R,1) int32, rowmask (3BS,1) f32 -> (B,T,V) log-probs."""
    Bb, Tt = bt_shape
    Vp = p["w_out_pad"].shape[1]
    vmem = pl.BlockSpec(memory_space=pltpu.MemorySpace.VMEM)
    out_pad = pl.pallas_call(
        _fused_kernel,
        out_shape=jax.ShapeDtypeStruct((Bb, Tt, Vp), jnp.float32),
        in_specs=[vmem] * 10,
        out_specs=vmem,
    )(ids_flat, rowmask,
      p["emb_table"], p["w_enc"], p["b_enc"],
      p["w_q"], p["w_ctx_stack"], p["b_comb"],
      p["w_out_pad"], p["b_out_pad"])
    return out_pad[:, :, :V]          # drop the lane-padding columns


# ----------------------------- module ---------------------------------------
class FbSeq2seq:
    """JAX/Pallas re-implementation of FbSeq2seq.forward."""

    def __init__(self, params, id2word_dict=None, decode_function="log_softmax"):
        self.params = params
        self.id2word = id2word_dict
        self.decode_function = decode_function  # log_softmax is fused in the kernel

    def __call__(self, input_variable, prev_title, prev_generated_seq=None,
                 input_lengths=None, target_variable=None, teacher_forcing_ratio=0):
        p = self.params
        zeros_ids = jnp.zeros_like(input_variable)
        pt_ids = prev_title if prev_title is not None else zeros_ids
        pg_ids = prev_generated_seq if prev_generated_seq is not None else zeros_ids
        stream_mask = jnp.array(
            [1.0,
             1.0 if prev_title is not None else 0.0,
             1.0 if prev_generated_seq is not None else 0.0],
            dtype=jnp.float32)

        Bb, Ss = input_variable.shape
        # stream-major row order: [title rows | prev-title rows | prev-draft
        # rows | target rows], flattened host-side so the kernel needs no
        # reshapes of the integer ids.
        ids_flat = jnp.concatenate(
            [input_variable.reshape(-1), pt_ids.reshape(-1),
             pg_ids.reshape(-1), target_variable.reshape(-1)]
        ).astype(jnp.int32)[:, None]                                # (R, 1)
        rowmask = jnp.repeat(stream_mask, Bb * Ss)[:, None]         # (3BS, 1)

        # TODO(synk): input_lengths is ignored (attention covers padding).
        # TODO(synk): teacher_forcing_ratio=0 would trigger stochastic
        # autoregressive decoding in the original; teacher-forced inputs
        # (target_variable) are always used here (no static-shape equivalent).
        return fb_seq2seq_forward(ids_flat, rowmask, target_variable.shape, p)


def init_params(key):
    ks = jax.random.split(key, 7)
    s = 0.1
    bf16 = jnp.bfloat16
    w_out = s * jax.random.normal(ks[6], (H, V), jnp.float32)
    # Lane-padded vocab projection: real weights in cols [:V], zero elsewhere;
    # padded bias columns get -1e30 so they vanish from the log_softmax sum.
    w_out_pad = jnp.zeros((H, VP), jnp.float32).at[:, :V].set(w_out)
    b_out_pad = jnp.full((1, VP), -1e30, jnp.float32).at[:, :V].set(0.0)
    # Per-stream context projections stacked for the batched value projection.
    w_ctx_stack = s * jax.random.normal(ks[3], (3, H, H), jnp.float32)
    return {
        "emb_table":   (s * jax.random.normal(ks[0], (V, H), jnp.float32)).astype(bf16),
        "w_enc":       (s * jax.random.normal(ks[1], (H, H), jnp.float32)).astype(bf16),
        "b_enc":       jnp.zeros((1, H), jnp.float32),
        "w_q":         (s * jax.random.normal(ks[2], (H, H), jnp.float32)).astype(bf16),
        "w_ctx_stack": w_ctx_stack.astype(bf16),
        "b_comb":      jnp.zeros((1, H), jnp.float32),
        "w_out_pad":   w_out_pad.astype(bf16),
        "b_out_pad":   b_out_pad,
    }


if __name__ == "__main__":
    key = jax.random.PRNGKey(0)
    k_p, k_in, k_pt, k_pg, k_tgt = jax.random.split(key, 5)

    params = init_params(k_p)
    model = FbSeq2seq(params, id2word_dict={i: f"tok{i}" for i in range(V)})

    input_variable = jax.random.randint(k_in, (B, S), 0, V, dtype=jnp.int32)
    prev_title = jax.random.randint(k_pt, (B, S), 0, V, dtype=jnp.int32)
    prev_generated_seq = jax.random.randint(k_pg, (B, S), 0, V, dtype=jnp.int32)
    target_variable = jax.random.randint(k_tgt, (B, T), 0, V, dtype=jnp.int32)

    result = model(input_variable, prev_title,
                   prev_generated_seq=prev_generated_seq,
                   target_variable=target_variable,
                   teacher_forcing_ratio=0)
    result = jax.block_until_ready(result)

    assert result.shape == (B, T, V)
    # log_softmax rows must sum to ~1 in prob space (padded cols contribute 0)
    assert jnp.allclose(jnp.sum(jnp.exp(result), axis=-1), 1.0, atol=1e-4)
    print("KERNEL_OK")
</pallas_src>

<mosaic_0001>
module attributes {stable_mosaic.version = 11 : i64} {
  func.func @_fused_kernel(%arg0: memref<64x1xi32, #tpu.memory_space<vmem>>, %arg1: memref<48x1xf32, #tpu.memory_space<vmem>>, %arg2: memref<64x32xbf16, #tpu.memory_space<vmem>>, %arg3: memref<32x32xbf16, #tpu.memory_space<vmem>>, %arg4: memref<1x32xf32, #tpu.memory_space<vmem>>, %arg5: memref<32x32xbf16, #tpu.memory_space<vmem>>, %arg6: memref<3x32x32xbf16, #tpu.memory_space<vmem>>, %arg7: memref<1x32xf32, #tpu.memory_space<vmem>>, %arg8: memref<32x128xbf16, #tpu.memory_space<vmem>>, %arg9: memref<1x128xf32, #tpu.memory_space<vmem>>, %arg10: memref<2x8x128xf32, #tpu.memory_space<vmem>>) attributes {dimension_semantics = [], scalar_prefetch = 0 : i64, scratch_operands = 0 : i64, tpu.core_type = #tpu.core_type<tc>} {
    %c0 = arith.constant 0 : index
    %c0_0 = arith.constant 0 : index
    %0 = vector.load %arg0[%c0, %c0_0] : memref<64x1xi32, #tpu.memory_space<vmem>>, vector<64x1xi32>
    %1 = tpu.iota {dimensions = array<i32: 1>} : vector<64x64xi32>
    %2 = vector.broadcast %0 : vector<64x1xi32> to vector<64x64xi32>
    %3 = arith.cmpi eq, %2, %1 : vector<64x64xi32>
    %4 = arith.extui %3 : vector<64x64xi1> to vector<64x64xi32>
    %5 = arith.sitofp %4 : vector<64x64xi32> to vector<64x64xf32>
    %6 = arith.truncf %5 : vector<64x64xf32> to vector<64x64xbf16>
    %c0_1 = arith.constant 0 : index
    %c0_2 = arith.constant 0 : index
    %7 = vector.load %arg2[%c0_1, %c0_2] : memref<64x32xbf16, #tpu.memory_space<vmem>>, vector<64x32xbf16>
    %cst = arith.constant dense<0.000000e+00> : vector<64x32xf32>
    %8 = tpu.matmul %6, %7, %cst {dimension_numbers = #tpu.dot_dimension_numbers<[1], [0], [0], [1], [0, 0, 1, 1], [], []>} : vector<64x64xbf16>, vector<64x32xbf16>, vector<64x32xf32> -> vector<64x32xf32>
    %9 = vector.extract_strided_slice %8 {offsets = [0, 0], sizes = [48, 32], strides = [1, 1]} : vector<64x32xf32> to vector<48x32xf32>
    %10 = vector.extract_strided_slice %8 {offsets = [48, 0], sizes = [16, 32], strides = [1, 1]} : vector<64x32xf32> to vector<16x32xf32>
    %11 = arith.truncf %9 : vector<48x32xf32> to vector<48x32xbf16>
    %c0_3 = arith.constant 0 : index
    %c0_4 = arith.constant 0 : index
    %12 = vector.load %arg3[%c0_3, %c0_4] : memref<32x32xbf16, #tpu.memory_space<vmem>>, vector<32x32xbf16>
    %cst_5 = arith.constant dense<0.000000e+00> : vector<48x32xf32>
    %13 = tpu.matmul %11, %12, %cst_5 {dimension_numbers = #tpu.dot_dimension_numbers<[1], [0], [0], [1], [0, 0, 1, 1], [], []>} : vector<48x32xbf16>, vector<32x32xbf16>, vector<48x32xf32> -> vector<48x32xf32>
    %c0_6 = arith.constant 0 : index
    %c0_7 = arith.constant 0 : index
    %14 = vector.load %arg4[%c0_6, %c0_7] : memref<1x32xf32, #tpu.memory_space<vmem>>, vector<1x32xf32>
    %15 = vector.broadcast %14 : vector<1x32xf32> to vector<48x32xf32>
    %16 = arith.addf %13, %15 : vector<48x32xf32>
    %17 = math.tanh %16 : vector<48x32xf32>
    %c0_8 = arith.constant 0 : index
    %c0_9 = arith.constant 0 : index
    %18 = vector.load %arg1[%c0_8, %c0_9] : memref<48x1xf32, #tpu.memory_space<vmem>>, vector<48x1xf32>
    %19 = vector.broadcast %18 : vector<48x1xf32> to vector<48x32xf32>
    %20 = arith.mulf %17, %19 : vector<48x32xf32>
    %21 = arith.truncf %20 : vector<48x32xf32> to vector<48x32xbf16>
    %22 = vector.extract_strided_slice %20 {offsets = [0, 0], sizes = [16, 32], strides = [1, 1]} : vector<48x32xf32> to vector<16x32xf32>
    %23 = vector.shape_cast %22 : vector<16x32xf32> to vector<2x8x32xf32>
    %cst_10 = arith.constant dense<0.000000e+00> : vector<2x32xf32>
    %24 = vector.multi_reduction <add>, %23, %cst_10 [1] : vector<2x8x32xf32> to vector<2x32xf32>
    %25 = vector.shape_cast %24 : vector<2x32xf32> to vector<2x1x32xf32>
    %cst_11 = arith.constant 8.000000e+00 : f32
    %26 = vector.broadcast %cst_11 : f32 to vector<2x1x32xf32>
    %27 = arith.divf %25, %26 : vector<2x1x32xf32>
    %28 = arith.truncf %10 : vector<16x32xf32> to vector<16x32xbf16>
    %29 = vector.shape_cast %28 : vector<16x32xbf16> to vector<2x8x32xbf16>
    %30 = tpu.concatenate %29, %29, %29 in 0 : vector<2x8x32xbf16>, vector<2x8x32xbf16>, vector<2x8x32xbf16> -> vector<6x8x32xbf16>
    %31 = vector.shape_cast %21 : vector<48x32xbf16> to vector<6x8x32xbf16>
    "tpu.trace_start"() <{level = 10 : i32, message = "gtd,gsd->gts"}> : () -> ()
    %cst_12 = arith.constant dense<0.000000e+00> : vector<6x8x8xf32>
    %32 = tpu.matmul %30, %31, %cst_12 {dimension_numbers = #tpu.dot_dimension_numbers<[2], [2], [1], [1], [0, 0, 0, 1, 1, 1], [0], [0]>} : vector<6x8x32xbf16>, vector<6x8x32xbf16>, vector<6x8x8xf32> -> vector<6x8x8xf32>
    "tpu.trace_stop"() : () -> ()
    %cst_13 = arith.constant dense<0xFF800000> : vector<6x8xf32>
    %33 = vector.multi_reduction <maximumf>, %32, %cst_13 [2] : vector<6x8x8xf32> to vector<6x8xf32>
    %34 = vector.shape_cast %33 : vector<6x8xf32> to vector<6x8x1xf32>
    %35 = vector.broadcast %34 : vector<6x8x1xf32> to vector<6x8x8xf32>
    %36 = arith.subf %32, %35 : vector<6x8x8xf32>
    %37 = math.exp %36 : vector<6x8x8xf32>
    %cst_14 = arith.constant dense<0.000000e+00> : vector<6x8xf32>
    %38 = vector.multi_reduction <add>, %37, %cst_14 [2] : vector<6x8x8xf32> to vector<6x8xf32>
    %39 = vector.shape_cast %38 : vector<6x8xf32> to vector<6x8x1xf32>
    %40 = tpu.reciprocal %39 {approx = true} : vector<6x8x1xf32> -> vector<6x8x1xf32>
    %41 = vector.broadcast %40 : vector<6x8x1xf32> to vector<6x8x8xf32>
    %42 = arith.mulf %37, %41 : vector<6x8x8xf32>
    %43 = vector.shape_cast %21 : vector<48x32xbf16> to vector<3x16x32xbf16>
    %c0_15 = arith.constant 0 : index
    %c0_16 = arith.constant 0 : index
    %c0_17 = arith.constant 0 : index
    %44 = vector.load %arg6[%c0_15, %c0_16, %c0_17] : memref<3x32x32xbf16, #tpu.memory_space<vmem>>, vector<3x32x32xbf16>
    "tpu.trace_start"() <{level = 10 : i32, message = "nrd,ndh->nrh"}> : () -> ()
    %cst_18 = arith.constant dense<0.000000e+00> : vector<3x16x32xf32>
    %45 = tpu.matmul %43, %44, %cst_18 {dimension_numbers = #tpu.dot_dimension_numbers<[2], [1], [1], [2], [0, 0, 0, 1, 1, 2], [0], [0]>} : vector<3x16x32xbf16>, vector<3x32x32xbf16>, vector<3x16x32xf32> -> vector<3x16x32xf32>
    "tpu.trace_stop"() : () -> ()
    %46 = arith.truncf %45 : vector<3x16x32xf32> to vector<3x16x32xbf16>
    %47 = vector.shape_cast %46 : vector<3x16x32xbf16> to vector<6x8x32xbf16>
    %48 = arith.truncf %42 : vector<6x8x8xf32> to vector<6x8x8xbf16>
    "tpu.trace_start"() <{level = 10 : i32, message = "gts,gsd->gtd"}> : () -> ()
    %cst_19 = arith.constant dense<0.000000e+00> : vector<6x8x32xf32>
    %49 = tpu.matmul %48, %47, %cst_19 {dimension_numbers = #tpu.dot_dimension_numbers<[2], [1], [1], [2], [0, 0, 0, 1, 1, 2], [0], [0]>} : vector<6x8x8xbf16>, vector<6x8x32xbf16>, vector<6x8x32xf32> -> vector<6x8x32xf32>
    "tpu.trace_stop"() : () -> ()
    %50 = vector.extract_strided_slice %49 {offsets = [0, 0, 0], sizes = [2, 8, 32], strides = [1, 1, 1]} : vector<6x8x32xf32> to vector<2x8x32xf32>
    %51 = vector.extract_strided_slice %49 {offsets = [2, 0, 0], sizes = [2, 8, 32], strides = [1, 1, 1]} : vector<6x8x32xf32> to vector<2x8x32xf32>
    %52 = arith.addf %50, %51 : vector<2x8x32xf32>
    %53 = vector.extract_strided_slice %49 {offsets = [4, 0, 0], sizes = [2, 8, 32], strides = [1, 1, 1]} : vector<6x8x32xf32> to vector<2x8x32xf32>
    %54 = arith.addf %52, %53 : vector<2x8x32xf32>
    %55 = arith.truncf %10 : vector<16x32xf32> to vector<16x32xbf16>
    %c0_20 = arith.constant 0 : index
    %c0_21 = arith.constant 0 : index
    %56 = vector.load %arg5[%c0_20, %c0_21] : memref<32x32xbf16, #tpu.memory_space<vmem>>, vector<32x32xbf16>
    %cst_22 = arith.constant dense<0.000000e+00> : vector<16x32xf32>
    %57 = tpu.matmul %55, %56, %cst_22 {dimension_numbers = #tpu.dot_dimension_numbers<[1], [0], [0], [1], [0, 0, 1, 1], [], []>} : vector<16x32xbf16>, vector<32x32xbf16>, vector<16x32xf32> -> vector<16x32xf32>
    %58 = vector.shape_cast %57 : vector<16x32xf32> to vector<2x8x32xf32>
    %59 = arith.addf %54, %58 : vector<2x8x32xf32>
    %60 = vector.broadcast %27 : vector<2x1x32xf32> to vector<2x8x32xf32>
    %61 = arith.addf %59, %60 : vector<2x8x32xf32>
    %c0_23 = arith.constant 0 : index
    %c0_24 = arith.constant 0 : index
    %62 = vector.load %arg7[%c0_23, %c0_24] : memref<1x32xf32, #tpu.memory_space<vmem>>, vector<1x32xf32>
    %63 = vector.shape_cast %62 : vector<1x32xf32> to vector<1x1x32xf32>
    %64 = vector.broadcast %63 : vector<1x1x32xf32> to vector<2x8x32xf32>
    %65 = arith.addf %61, %64 : vector<2x8x32xf32>
    %66 = math.tanh %65 : vector<2x8x32xf32>
    %67 = vector.shape_cast %66 : vector<2x8x32xf32> to vector<16x32xf32>
    %68 = arith.truncf %67 : vector<16x32xf32> to vector<16x32xbf16>
    %c0_25 = arith.constant 0 : index
    %c0_26 = arith.constant 0 : index
    %69 = vector.load %arg8[%c0_25, %c0_26] : memref<32x128xbf16, #tpu.memory_space<vmem>>, vector<32x128xbf16>
    %cst_27 = arith.constant dense<0.000000e+00> : vector<16x128xf32>
    %70 = tpu.matmul %68, %69, %cst_27 {dimension_numbers = #tpu.dot_dimension_numbers<[1], [0], [0], [1], [0, 0, 1, 1], [], []>} : vector<16x32xbf16>, vector<32x128xbf16>, vector<16x128xf32> -> vector<16x128xf32>
    %c0_28 = arith.constant 0 : index
    %c0_29 = arith.constant 0 : index
    %71 = vector.load %arg9[%c0_28, %c0_29] : memref<1x128xf32, #tpu.memory_space<vmem>>, vector<1x128xf32>
    %72 = vector.broadcast %71 : vector<1x128xf32> to vector<16x128xf32>
    %73 = arith.addf %70, %72 : vector<16x128xf32>
    %cst_30 = arith.constant dense<0xFF800000> : vector<16xf32>
    %74 = vector.multi_reduction <maximumf>, %73, %cst_30 [1] : vector<16x128xf32> to vector<16xf32>
    %75 = vector.shape_cast %74 : vector<16xf32> to vector<16x1xf32>
    %76 = vector.broadcast %75 : vector<16x1xf32> to vector<16x128xf32>
    %77 = arith.subf %73, %76 : vector<16x128xf32>
    %78 = math.exp %77 : vector<16x128xf32>
    %cst_31 = arith.constant dense<0.000000e+00> : vector<16xf32>
    %79 = vector.multi_reduction <add>, %78, %cst_31 [1] : vector<16x128xf32> to vector<16xf32>
    %80 = vector.shape_cast %79 : vector<16xf32> to vector<16x1xf32>
    %81 = math.log %80 : vector<16x1xf32>
    %82 = arith.addf %75, %81 : vector<16x1xf32>
    %83 = vector.broadcast %82 : vector<16x1xf32> to vector<16x128xf32>
    %84 = arith.subf %73, %83 : vector<16x128xf32>
    %85 = vector.shape_cast %84 : vector<16x128xf32> to vector<2x8x128xf32>
    %c0_32 = arith.constant 0 : index
    %c0_33 = arith.constant 0 : index
    %c0_34 = arith.constant 0 : index
    %86 = vector.load %arg10[%c0_32, %c0_33, %c0_34] : memref<2x8x128xf32, #tpu.memory_space<vmem>>, vector<2x8x128xf32>
    tpu.vector_store %arg10[%c0_32, %c0_33, %c0_34], %85 {strides = array<i32>} : memref<2x8x128xf32, #tpu.memory_space<vmem>>, vector<2x8x128xf32>,
    return
  }
}

</mosaic_0001>

<llo_original>
// kernel: tpu_custom_call.1
$region0: #{tpu_custom_call.1}
  #allocation0 [shape = 'u32[]', space=smem, size = 0x4, offset = 0x4, fixed_abs, tag = 'smem constant byte address 0x4 - core index']
  #allocation1 [shape = 'u32[72,128]{1,0:T(1,128)}', space=vmem, size = 0x9000, scoped, tag = 'internal scratch']
  %s0 = inlined_call_operand.vmem [shape: s32[64,1], index: 0, kind: input, shape index: {}]
  %s1 = inlined_call_operand.vmem [shape: f32[48,1], index: 1, kind: input, shape index: {}]
  %s2 = inlined_call_operand.vmem [shape: bf16[64,32], index: 2, kind: input, shape index: {}]
  %s3 = inlined_call_operand.vmem [shape: bf16[32,32], index: 3, kind: input, shape index: {}]
  %s4 = inlined_call_operand.vmem [shape: f32[1,32], index: 4, kind: input, shape index: {}]
  %s5 = inlined_call_operand.vmem [shape: bf16[32,32], index: 5, kind: input, shape index: {}]
  %s6 = inlined_call_operand.vmem [shape: bf16[3,32,32], index: 6, kind: input, shape index: {}]
  %s7 = inlined_call_operand.vmem [shape: f32[1,32], index: 7, kind: input, shape index: {}]
  %s8 = inlined_call_operand.vmem [shape: bf16[32,128], index: 8, kind: input, shape index: {}]
  %s9 = inlined_call_operand.vmem [shape: f32[1,128], index: 9, kind: input, shape index: {}]
  %s10 = inlined_call_operand.hbm [shape: f32[2,8,128], index: 10, kind: output, shape index: {}]
  %s11 = sld [smem:[#allocation0]]
  $region50: #{tpu_custom_call.1} parent=0
    _
  %s13 = ssub.s32 1, %s11
  %s14 = scalar_select 0, %s13, %s11
  $region1: #{tpu_custom_call.1} parent=0
    #allocation2 [shape = 'u8[8192]{0}', space=vmem, size = 0x2000, scoped, tag = 'output window, operand 0, single buffered']
    #allocation3 [shape = 's32[1]{0}', space=sflag, size = 0x4, scoped, tag = 'scoped memory for tpu_custom_call.1']
    %15 = vsyncpa [#allocation3], 0
    // Predicated region
    $region2: #{tpu_custom_call.1} parent=1 // pred_check
      _
    $region3: #{tpu_custom_call.1} parent=1 // pred_check_branch
      %17 = sbr.rel (0) target = $region5
    $region4: #{tpu_custom_call.1} parent=1 // pred_region
      _
    $region5: #{tpu_custom_call.1} parent=1 // pred_fallthru
      _
    // Predicated region
    $region6: #{tpu_custom_call.1} parent=1 // pred_check
      _
    $region7: #{tpu_custom_call.1} parent=1 // pred_check_branch
      %19 = sbr.rel (0) target = $region9
    $region8: #{tpu_custom_call.1} parent=1 // pred_region
      _
    $region9: #{tpu_custom_call.1} parent=1 // pred_fallthru
      _
    // Predicated region
    $region10: #{tpu_custom_call.1} parent=1 // pred_check
      _
    $region11: #{tpu_custom_call.1} parent=1 // pred_check_branch
      %21 = sbr.rel (0) target = $region13
    $region12: #{tpu_custom_call.1} parent=1 // pred_region
      _
    $region13: #{tpu_custom_call.1} parent=1 // pred_fallthru
      _
    // Predicated region
    $region14: #{tpu_custom_call.1} parent=1 // pred_check
      _
    $region15: #{tpu_custom_call.1} parent=1 // pred_check_branch
      %23 = sbr.rel (0) target = $region17
    $region16: #{tpu_custom_call.1} parent=1 // pred_region
      _
    $region17: #{tpu_custom_call.1} parent=1 // pred_fallthru
      _
    // Predicated region
    $region18: #{tpu_custom_call.1} parent=1 // pred_check
      _
    $region19: #{tpu_custom_call.1} parent=1 // pred_check_branch
      %25 = sbr.rel (0) target = $region21
    $region20: #{tpu_custom_call.1} parent=1 // pred_region
      _
    $region21: #{tpu_custom_call.1} parent=1 // pred_fallthru
      _
    // Predicated region
    $region22: #{tpu_custom_call.1} parent=1 // pred_check
      _
    $region23: #{tpu_custom_call.1} parent=1 // pred_check_branch
      %27 = sbr.rel (0) target = $region25
    $region24: #{tpu_custom_call.1} parent=1 // pred_region
      _
    $region25: #{tpu_custom_call.1} parent=1 // pred_fallthru
      _
    // Predicated region
    $region26: #{tpu_custom_call.1} parent=1 // pred_check
      _
    $region27: #{tpu_custom_call.1} parent=1 // pred_check_branch
      %29 = sbr.rel (0) target = $region29
    $region28: #{tpu_custom_call.1} parent=1 // pred_region
      _
    $region29: #{tpu_custom_call.1} parent=1 // pred_fallthru
      _
    // Predicated region
    $region30: #{tpu_custom_call.1} parent=1 // pred_check
      _
    $region31: #{tpu_custom_call.1} parent=1 // pred_check_branch
      %31 = sbr.rel (0) target = $region33
    $region32: #{tpu_custom_call.1} parent=1 // pred_region
      _
    $region33: #{tpu_custom_call.1} parent=1 // pred_fallthru
      _
    // Predicated region
    $region34: #{tpu_custom_call.1} parent=1 // pred_check
      _
    $region35: #{tpu_custom_call.1} parent=1 // pred_check_branch
      %33 = sbr.rel (0) target = $region37
    $region36: #{tpu_custom_call.1} parent=1 // pred_region
      _
    $region37: #{tpu_custom_call.1} parent=1 // pred_fallthru
      _
    // Predicated region
    $region38: #{tpu_custom_call.1} parent=1 // pred_check
      _
    $region39: #{tpu_custom_call.1} parent=1 // pred_check_branch
      %35 = sbr.rel (0) target = $region41
    $region40: #{tpu_custom_call.1} parent=1 // pred_region
      _
    $region41: #{tpu_custom_call.1} parent=1 // pred_fallthru
      _
    %v37 = vld [vmem:[%s0] sm:$0xff]
    %v38 = vld [vmem:[%s0 + $0x8] sm:$0xff]
    %v39 = vld [vmem:[%s0 + $0x10] sm:$0xff]
    %v40 = vld [vmem:[%s0 + $0x18] sm:$0xff]
    %v41 = vld [vmem:[%s0 + $0x20] sm:$0xff]
    %v42 = vld [vmem:[%s0 + $0x28] sm:$0xff]
    %v43 = vld [vmem:[%s0 + $0x30] sm:$0xff]
    %v44 = vld [vmem:[%s0 + $0x38] sm:$0xff]
    %v45 = vlaneseq
    %v46 = vand.u32 %v45, 127
    %47 = vset.pattern.permute.xlu0 0
    %48 = vperm.xlu0 %47, %v37
    %v49 = vpop.permute.xlu0 %48
    %50 = vset.pattern.permute.xlu0 0
    %51 = vperm.xlu0 %50, %v38
    %v52 = vpop.permute.xlu0 %51
    %53 = vset.pattern.permute.xlu0 0
    %54 = vperm.xlu0 %53, %v39
    %v55 = vpop.permute.xlu0 %54
    %56 = vset.pattern.permute.xlu0 0
    %57 = vperm.xlu0 %56, %v40
    %v58 = vpop.permute.xlu0 %57
    %59 = vset.pattern.permute.xlu0 0
    %60 = vperm.xlu0 %59, %v41
    %v61 = vpop.permute.xlu0 %60
    %62 = vset.pattern.permute.xlu0 0
    %63 = vperm.xlu0 %62, %v42
    %v64 = vpop.permute.xlu0 %63
    %65 = vset.pattern.permute.xlu0 0
    %66 = vperm.xlu0 %65, %v43
    %v67 = vpop.permute.xlu0 %66
    %68 = vset.pattern.permute.xlu0 0
    %69 = vperm.xlu0 %68, %v44
    %v70 = vpop.permute.xlu0 %69
    %vm71 = vcmp.eq.s32.totalorder %v49, %v46
    %vm72 = vcmp.eq.s32.totalorder %v52, %v46
    %vm73 = vcmp.eq.s32.totalorder %v55, %v46
    %vm74 = vcmp.eq.s32.totalorder %v58, %v46
    %vm75 = vcmp.eq.s32.totalorder %v61, %v46
    %vm76 = vcmp.eq.s32.totalorder %v64, %v46
    %vm77 = vcmp.eq.s32.totalorder %v67, %v46
    %vm78 = vcmp.eq.s32.totalorder %v70, %v46
    %v79 = vsel %vm71, 1, 0
    %v80 = vsel %vm72, 1, 0
    %v81 = vsel %vm73, 1, 0
    %v82 = vsel %vm74, 1, 0
    %v83 = vsel %vm75, 1, 0
    %v84 = vsel %vm76, 1, 0
    %v85 = vsel %vm77, 1, 0
    %v86 = vsel %vm78, 1, 0
    %v87 = vcvt.s32.f32 %v79
    %v88 = vcvt.s32.f32 %v80
    %v89 = vcvt.s32.f32 %v81
    %v90 = vcvt.s32.f32 %v82
    %v91 = vcvt.s32.f32 %v83
    %v92 = vcvt.s32.f32 %v84
    %v93 = vcvt.s32.f32 %v85
    %v94 = vcvt.s32.f32 %v86
    %v95 = vpack.c.bf16 %v88, %v87
    %v96 = vpack.c.bf16 %v90, %v89
    %v97 = vpack.c.bf16 %v92, %v91
    %v98 = vpack.c.bf16 %v94, %v93
    %v99 = vld [vmem:[%s2] sm:$0xf]
    %v100 = vld [vmem:[%s2 + $0x4] sm:$0xf]
    %v101 = vld [vmem:[%s2 + $0x8] sm:$0xf]
    %v102 = vld [vmem:[%s2 + $0xc] sm:$0xf]
    %v103 = vld [vmem:[%s2 + $0x10] sm:$0xf]
    %v104 = vld [vmem:[%s2 + $0x14] sm:$0xf]
    %v105 = vld [vmem:[%s2 + $0x18] sm:$0xf]
    %v106 = vld [vmem:[%s2 + $0x1c] sm:$0xf]
    %v115 = vunpack.c.l.b16 %v99
    %v116 = vunpack.c.l.b16 %v100
    %v117 = vunpack.c.l.b16 %v101
    %v118 = vunpack.c.l.b16 %v102
    %v119 = vunpack.c.l.b16 %v103
    %v120 = vunpack.c.l.b16 %v104
    %v121 = vunpack.c.l.b16 %v105
    %v122 = vunpack.c.l.b16 %v106
    %v123 = vpack.c.b16 %v116, %v115
    %v124 = vpack.c.b16 %v118, %v117
    %v125 = vpack.c.b16 %v120, %v119
    %v126 = vpack.c.b16 %v122, %v121
    %vm131 = vcmask 523264
    %v133 = vsel %vm131, %v95, 0
    %v136 = vsel %vm131, %v96, 0
    %v139 = vsel %vm131, %v97, 0
    %v142 = vsel %vm131, %v98, 0
    %144 = vmatpush.bf16.msra.mxu0 0
    %145 = vmatpush.bf16.msra.mxu0 0
    %146 = vmatpush.bf16.msra.mxu0 0
    %147 = vmatpush.bf16.msra.mxu0 0
    %148 = vmatpush.bf16.msra.mxu0 %v126
    %149 = vmatpush.bf16.msra.mxu0 %v125
    %150 = vmatpush.bf16.msra.mxu0 %v124
    %151 = vmatpush.bf16.msra.mxu0 %v123
    %152 = vmatmul.bf16.gmra.mxu0 %v133
    %v153 = vpop.f32.mrf.mxu0
    %v154 = vadd.f32 0.0, %v153
    %v155 = vpop.f32.mrf.mxu0
    %v156 = vadd.f32 0.0, %v155
    %157 = vmatmul.bf16.gmra.mxu0 %v136
    %v158 = vpop.f32.mrf.mxu0
    %v159 = vadd.f32 0.0, %v158
    %v160 = vpop.f32.mrf.mxu0
    %v161 = vadd.f32 0.0, %v160
    %162 = vmatmul.bf16.gmra.mxu0 %v139
    %v163 = vpop.f32.mrf.mxu0
    %v164 = vadd.f32 0.0, %v163
    %v165 = vpop.f32.mrf.mxu0
    %v166 = vadd.f32 0.0, %v165
    %167 = vmatmul.bf16.gmra.mxu0 %v142
    %v168 = vpop.f32.mrf.mxu0
    %v169 = vadd.f32 0.0, %v168
    %v170 = vpop.f32.mrf.mxu0
    %v171 = vadd.f32 0.0, %v170
    %172 = vdwg.mxu0
    %v173 = vpack.c.bf16 %v156, %v154
    %v174 = vpack.c.bf16 %v161, %v159
    %v175 = vpack.c.bf16 %v166, %v164
    %v176 = vld [vmem:[%s3] sm:$0xf]
    %v177 = vld [vmem:[%s3 + $0x4] sm:$0xf]
    %v178 = vld [vmem:[%s3 + $0x8] sm:$0xf]
    %v179 = vld [vmem:[%s3 + $0xc] sm:$0xf]
    %v180 = vld [vmem:[%s4] sm:$0x1]
    %v182 = vperm.slane %v180, 0
    %v188 = vunpack.c.l.b16 %v176
    %v189 = vunpack.c.l.b16 %v177
    %v190 = vunpack.c.l.b16 %v178
    %v191 = vunpack.c.l.b16 %v179
    %v192 = vpack.c.b16 %v189, %v188
    %v193 = vpack.c.b16 %v191, %v190
    %vm196 = vcmask 261120
    %v198 = vsel %vm196, %v173, 0
    %v201 = vsel %vm196, %v174, 0
    %v204 = vsel %vm196, %v175, 0
    %206 = vmatpush.bf16.msra.mxu0 0
    %207 = vmatpush.bf16.msra.mxu0 0
    %208 = vmatpush.bf16.msra.mxu0 0
    %209 = vmatpush.bf16.msra.mxu0 0
    %210 = vmatpush.bf16.msra.mxu0 0
    %211 = vmatpush.bf16.msra.mxu0 0
    %212 = vmatpush.bf16.msra.mxu0 %v193
    %213 = vmatpush.bf16.msra.mxu0 %v192
    %214 = vmatmul.bf16.gmra.mxu0 %v198
    %v215 = vpop.f32.mrf.mxu0
    %v216 = vadd.f32 %v182, %v215
    %v217 = vpop.f32.mrf.mxu0
    %v218 = vadd.f32 %v182, %v217
    %219 = vmatmul.bf16.gmra.mxu0 %v201
    %v220 = vpop.f32.mrf.mxu0
    %v221 = vadd.f32 %v182, %v220
    %v222 = vpop.f32.mrf.mxu0
    %v223 = vadd.f32 %v182, %v222
    %224 = vmatmul.bf16.gmra.mxu0 %v204
    %v225 = vpop.f32.mrf.mxu0
    %v226 = vadd.f32 %v182, %v225
    %v227 = vpop.f32.mrf.mxu0
    %v228 = vadd.f32 %v182, %v227
    %229 = vdwg.mxu0
    %v230 = vtanh.pop %v216
    %v231 = vtanh.pop %v218
    %v232 = vtanh.pop %v221
    %v233 = vtanh.pop %v223
    %v234 = vtanh.pop %v226
    %v235 = vtanh.pop %v228
    %v236 = vld [vmem:[%s1] sm:$0xff]
    %v237 = vld [vmem:[%s1 + $0x8] sm:$0xff]
    %v238 = vld [vmem:[%s1 + $0x10] sm:$0xff]
    %v239 = vld [vmem:[%s1 + $0x18] sm:$0xff]
    %v240 = vld [vmem:[%s1 + $0x20] sm:$0xff]
    %v241 = vld [vmem:[%s1 + $0x28] sm:$0xff]
    %243 = vset.pattern.permute.xlu0 0
    %244 = vperm.xlu0 %243, %v236
    %v245 = vpop.permute.xlu0 %244
    %248 = vset.pattern.permute.xlu0 0
    %249 = vperm.xlu0 %248, %v237
    %v250 = vpop.permute.xlu0 %249
    %253 = vset.pattern.permute.xlu0 0
    %254 = vperm.xlu0 %253, %v238
    %v255 = vpop.permute.xlu0 %254
    %258 = vset.pattern.permute.xlu0 0
    %259 = vperm.xlu0 %258, %v239
    %v260 = vpop.permute.xlu0 %259
    %263 = vset.pattern.permute.xlu0 0
    %264 = vperm.xlu0 %263, %v240
    %v265 = vpop.permute.xlu0 %264
    %268 = vset.pattern.permute.xlu0 0
    %269 = vperm.xlu0 %268, %v241
    %v270 = vpop.permute.xlu0 %269
    %v272 = vmul.f32 %v230, %v245
    %v273 = vmul.f32 %v231, %v250
    %v274 = vmul.f32 %v232, %v255
    %v275 = vmul.f32 %v233, %v260
    %v276 = vmul.f32 %v234, %v265
    %v277 = vmul.f32 %v235, %v270
    %v278 = vpack.c.bf16 %v272, %v272
    %v279 = vpack.c.bf16 %v273, %v273
    %v280 = vpack.c.bf16 %v274, %v274
    %v281 = vpack.c.bf16 %v275, %v275
    %v282 = vpack.c.bf16 %v276, %v276
    %v283 = vpack.c.bf16 %v277, %v277
    %v284 = vsel %vm196, %v272, 0.0
    %v285 = vrot.slane %v284, 4
    %v286 = vadd.f32 %v284, %v285
    %v287 = vrot.slane %v286, 2
    %v288 = vadd.f32 %v286, %v287
    %v289 = vrot.slane %v288, 1
    %v290 = vadd.f32 %v288, %v289
    %v291 = vsel %vm196, %v273, 0.0
    %v292 = vrot.slane %v291, 4
    %v293 = vadd.f32 %v291, %v292
    %v294 = vrot.slane %v293, 2
    %v295 = vadd.f32 %v293, %v294
    %v296 = vrot.slane %v295, 1
    %v297 = vadd.f32 %v295, %v296
    %v298 = vrcp.pop 8.0
    %v299 = vmul.f32 8.0, %v298
    %v300 = vsub.f32 1.0, %v299
    %v301 = vmul.f32 %v298, %v300
    %v302 = vadd.f32 %v298, %v301
    %vm303 = vweird.f32 %v298
    %v304 = vsel %vm303, %v298, %v302
    %v305 = vmul.f32 %v290, %v304
    %v306 = vmul.f32 %v297, %v304
    %v307 = vpack.c.bf16 %v169, %v169
    %v308 = vpack.c.bf16 %v171, %v171
    %v310 = vsel %vm196, %v307, 0
    %v313 = vsel %vm196, %v278, 0
    %315 = vmatpush.bf16.xpose.msra.mxu0 0
    %316 = vmatpush.bf16.xpose.msra.mxu0 0
    %317 = vmatpush.bf16.xpose.msra.mxu0 0
    %318 = vmatpush.bf16.xpose.msra.mxu0 0
    %319 = vmatpush.bf16.xpose.msra.mxu0 0
    %320 = vmatpush.bf16.xpose.msra.mxu0 0
    %321 = vmatpush.bf16.xpose.msra.mxu0 0
    %322 = vmatpush.bf16.xpose.msra.mxu0 %v313
    %323 = vmatmul.bf16.gmra.mxu0 %v310
    %v324 = vpop.f32.mrf.mxu0
    %v325 = vadd.f32 0.0, %v324
    %v326 = vpop.f32.mrf.mxu0
    %327 = vdwg.mxu0
    %v329 = vsel %vm196, %v308, 0
    %v332 = vsel %vm196, %v279, 0
    %334 = vmatpush.bf16.xpose.msra.mxu0 0
    %335 = vmatpush.bf16.xpose.msra.mxu0 0
    %336 = vmatpush.bf16.xpose.msra.mxu0 0
    %337 = vmatpush.bf16.xpose.msra.mxu0 0
    %338 = vmatpush.bf16.xpose.msra.mxu0 0
    %339 = vmatpush.bf16.xpose.msra.mxu0 0
    %340 = vmatpush.bf16.xpose.msra.mxu0 0
    %341 = vmatpush.bf16.xpose.msra.mxu0 %v332
    %342 = vmatmul.bf16.gmra.mxu0 %v329
    %v343 = vpop.f32.mrf.mxu0
    %v344 = vadd.f32 0.0, %v343
    %v345 = vpop.f32.mrf.mxu0
    %346 = vdwg.mxu0
    %v348 = vsel %vm196, %v280, 0
    %350 = vmatpush.bf16.xpose.msra.mxu0 0
    %351 = vmatpush.bf16.xpose.msra.mxu0 0
    %352 = vmatpush.bf16.xpose.msra.mxu0 0
    %353 = vmatpush.bf16.xpose.msra.mxu0 0
    %354 = vmatpush.bf16.xpose.msra.mxu0 0
    %355 = vmatpush.bf16.xpose.msra.mxu0 0
    %356 = vmatpush.bf16.xpose.msra.mxu0 0
    %357 = vmatpush.bf16.xpose.msra.mxu0 %v348
    %358 = vmatmul.bf16.gmra.mxu0 %v310
    %v359 = vpop.f32.mrf.mxu0
    %v360 = vadd.f32 0.0, %v359
    %v361 = vpop.f32.mrf.mxu0
    %362 = vdwg.mxu0
    %v364 = vsel %vm196, %v281, 0
    %366 = vmatpush.bf16.xpose.msra.mxu0 0
    %367 = vmatpush.bf16.xpose.msra.mxu0 0
    %368 = vmatpush.bf16.xpose.msra.mxu0 0
    %369 = vmatpush.bf16.xpose.msra.mxu0 0
    %370 = vmatpush.bf16.xpose.msra.mxu0 0
    %371 = vmatpush.bf16.xpose.msra.mxu0 0
    %372 = vmatpush.bf16.xpose.msra.mxu0 0
    %373 = vmatpush.bf16.xpose.msra.mxu0 %v364
    %374 = vmatmul.bf16.gmra.mxu0 %v329
    %v375 = vpop.f32.mrf.mxu0
    %v376 = vadd.f32 0.0, %v375
    %v377 = vpop.f32.mrf.mxu0
    %378 = vdwg.mxu0
    %v380 = vsel %vm196, %v282, 0
    %382 = vmatpush.bf16.xpose.msra.mxu0 0
    %383 = vmatpush.bf16.xpose.msra.mxu0 0
    %384 = vmatpush.bf16.xpose.msra.mxu0 0
    %385 = vmatpush.bf16.xpose.msra.mxu0 0
    %386 = vmatpush.bf16.xpose.msra.mxu0 0
    %387 = vmatpush.bf16.xpose.msra.mxu0 0
    %388 = vmatpush.bf16.xpose.msra.mxu0 0
    %389 = vmatpush.bf16.xpose.msra.mxu0 %v380
    %390 = vmatmul.bf16.gmra.mxu0 %v310
    %v391 = vpop.f32.mrf.mxu0
    %v392 = vadd.f32 0.0, %v391
    %v393 = vpop.f32.mrf.mxu0
    %394 = vdwg.mxu0
    %v396 = vsel %vm196, %v283, 0
    %398 = vmatpush.bf16.xpose.msra.mxu0 0
    %399 = vmatpush.bf16.xpose.msra.mxu0 0
    %400 = vmatpush.bf16.xpose.msra.mxu0 0
    %401 = vmatpush.bf16.xpose.msra.mxu0 0
    %402 = vmatpush.bf16.xpose.msra.mxu0 0
    %403 = vmatpush.bf16.xpose.msra.mxu0 0
    %404 = vmatpush.bf16.xpose.msra.mxu0 0
    %405 = vmatpush.bf16.xpose.msra.mxu0 %v396
    %406 = vmatmul.bf16.gmra.mxu0 %v329
    %v407 = vpop.f32.mrf.mxu0
    %v408 = vadd.f32 0.0, %v407
    %v409 = vpop.f32.mrf.mxu0
    %410 = vdwg.mxu0
    %vm411 = vcmask 64512
    %v412 = vsel %vm411, %v325, -inf
    %413 = vmax.xlane.f32.xlu0 %v412
    %v414 = vpop.xlane.xlu0 %413
    %v415 = vsel %vm411, %v344, -inf
    %416 = vmax.xlane.f32.xlu0 %v415
    %v417 = vpop.xlane.xlu0 %416
    %v418 = vsel %vm411, %v360, -inf
    %419 = vmax.xlane.f32.xlu0 %v418
    %v420 = vpop.xlane.xlu0 %419
    %v421 = vsel %vm411, %v376, -inf
    %422 = vmax.xlane.f32.xlu0 %v421
    %v423 = vpop.xlane.xlu0 %422
    %v424 = vsel %vm411, %v392, -inf
    %425 = vmax.xlane.f32.xlu0 %v424
    %v426 = vpop.xlane.xlu0 %425
    %v427 = vsel %vm411, %v408, -inf
    %428 = vmax.xlane.f32.xlu0 %v427
    %v429 = vpop.xlane.xlu0 %428
    %v430 = vsub.f32 %v325, %v414
    %v431 = vsub.f32 %v344, %v417
    %v432 = vsub.f32 %v360, %v420
    %v433 = vsub.f32 %v376, %v423
    %v434 = vsub.f32 %v392, %v426
    %v435 = vsub.f32 %v408, %v429
    %v436 = vmul.f32 %v430, 1.442695
    %v437 = vpow.pop %v436
    %v438 = vmul.f32 %v431, 1.442695
    %v439 = vpow.pop %v438
    %v440 = vmul.f32 %v432, 1.442695
    %v441 = vpow.pop %v440
    %v442 = vmul.f32 %v433, 1.442695
    %v443 = vpow.pop %v442
    %v444 = vmul.f32 %v434, 1.442695
    %v445 = vpow.pop %v444
    %v446 = vmul.f32 %v435, 1.442695
    %v447 = vpow.pop %v446
    %v448 = vsel %vm411, %v437, 0.0
    %449 = vadd.xlane.f32.xlu0 %v448
    %v450 = vpop.xlane.xlu0 %449
    %v451 = vsel %vm411, %v439, 0.0
    %452 = vadd.xlane.f32.xlu0 %v451
    %v453 = vpop.xlane.xlu0 %452
    %v454 = vsel %vm411, %v441, 0.0
    %455 = vadd.xlane.f32.xlu0 %v454
    %v456 = vpop.xlane.xlu0 %455
    %v457 = vsel %vm411, %v443, 0.0
    %458 = vadd.xlane.f32.xlu0 %v457
    %v459 = vpop.xlane.xlu0 %458
    %v460 = vsel %vm411, %v445, 0.0
    %461 = vadd.xlane.f32.xlu0 %v460
    %v462 = vpop.xlane.xlu0 %461
    %v463 = vsel %vm411, %v447, 0.0
    %464 = vadd.xlane.f32.xlu0 %v463
    %v465 = vpop.xlane.xlu0 %464
    %v466 = vrcp.pop %v450
    %v467 = vrcp.pop %v453
    %v468 = vrcp.pop %v456
    %v469 = vrcp.pop %v459
    %v470 = vrcp.pop %v462
    %v471 = vrcp.pop %v465
    %v472 = vmul.f32 %v437, %v466
    %v473 = vmul.f32 %v439, %v467
    %v474 = vmul.f32 %v441, %v468
    %v475 = vmul.f32 %v443, %v469
    %v476 = vmul.f32 %v445, %v470
    %v477 = vmul.f32 %v447, %v471
    %v478 = vld [vmem:[%s6] sm:$0xf]
    %v479 = vld [vmem:[%s6 + $0x4] sm:$0xf]
    %v480 = vld [vmem:[%s6 + $0x8] sm:$0xf]
    %v481 = vld [vmem:[%s6 + $0xc] sm:$0xf]
    %v482 = vld [vmem:[%s6 + $0x10] sm:$0xf]
    %v483 = vld [vmem:[%s6 + $0x14] sm:$0xf]
    %v484 = vld [vmem:[%s6 + $0x18] sm:$0xf]
    %v485 = vld [vmem:[%s6 + $0x1c] sm:$0xf]
    %v486 = vld [vmem:[%s6 + $0x20] sm:$0xf]
    %v487 = vld [vmem:[%s6 + $0x24] sm:$0xf]
    %v488 = vld [vmem:[%s6 + $0x28] sm:$0xf]
    %v489 = vld [vmem:[%s6 + $0x2c] sm:$0xf]
    %v492 = vunpack.c.l.b16 %v278
    %v493 = vunpack.c.l.b16 %v279
    %v494 = vpack.c.b16 %v493, %v492
    %v499 = vunpack.c.l.b16 %v478
    %v500 = vunpack.c.l.b16 %v479
    %v501 = vunpack.c.l.b16 %v480
    %v502 = vunpack.c.l.b16 %v481
    %v503 = vpack.c.b16 %v500, %v499
    %v504 = vpack.c.b16 %v502, %v501
    %v508 = vsel %vm196, %v494, 0
    %510 = vmatpush.bf16.msra.mxu0 0
    %511 = vmatpush.bf16.msra.mxu0 0
    %512 = vmatpush.bf16.msra.mxu0 0
    %513 = vmatpush.bf16.msra.mxu0 0
    %514 = vmatpush.bf16.msra.mxu0 0
    %515 = vmatpush.bf16.msra.mxu0 0
    %516 = vmatpush.bf16.msra.mxu0 %v504
    %517 = vmatpush.bf16.msra.mxu0 %v503
    %518 = vmatmul.bf16.gmra.mxu0 %v508
    %v519 = vpop.f32.mrf.mxu0
    %v520 = vadd.f32 0.0, %v519
    %v521 = vpop.f32.mrf.mxu0
    %v522 = vadd.f32 0.0, %v521
    %523 = vdwg.mxu0
    %v526 = vunpack.c.l.b16 %v280
    %v527 = vunpack.c.l.b16 %v281
    %v528 = vpack.c.b16 %v527, %v526
    %v533 = vunpack.c.l.b16 %v482
    %v534 = vunpack.c.l.b16 %v483
    %v535 = vunpack.c.l.b16 %v484
    %v536 = vunpack.c.l.b16 %v485
    %v537 = vpack.c.b16 %v534, %v533
    %v538 = vpack.c.b16 %v536, %v535
    %v542 = vsel %vm196, %v528, 0
    %544 = vmatpush.bf16.msra.mxu0 0
    %545 = vmatpush.bf16.msra.mxu0 0
    %546 = vmatpush.bf16.msra.mxu0 0
    %547 = vmatpush.bf16.msra.mxu0 0
    %548 = vmatpush.bf16.msra.mxu0 0
    %549 = vmatpush.bf16.msra.mxu0 0
    %550 = vmatpush.bf16.msra.mxu0 %v538
    %551 = vmatpush.bf16.msra.mxu0 %v537
    %552 = vmatmul.bf16.gmra.mxu0 %v542
    %v553 = vpop.f32.mrf.mxu0
    %v554 = vadd.f32 0.0, %v553
    %v555 = vpop.f32.mrf.mxu0
    %v556 = vadd.f32 0.0, %v555
    %557 = vdwg.mxu0
    %v560 = vunpack.c.l.b16 %v282
    %v561 = vunpack.c.l.b16 %v283
    %v562 = vpack.c.b16 %v561, %v560
    %v567 = vunpack.c.l.b16 %v486
    %v568 = vunpack.c.l.b16 %v487
    %v569 = vunpack.c.l.b16 %v488
    %v570 = vunpack.c.l.b16 %v489
    %v571 = vpack.c.b16 %v568, %v567
    %v572 = vpack.c.b16 %v570, %v569
    %v576 = vsel %vm196, %v562, 0
    %578 = vmatpush.bf16.msra.mxu0 0
    %579 = vmatpush.bf16.msra.mxu0 0
    %580 = vmatpush.bf16.msra.mxu0 0
    %581 = vmatpush.bf16.msra.mxu0 0
    %582 = vmatpush.bf16.msra.mxu0 0
    %583 = vmatpush.bf16.msra.mxu0 0
    %584 = vmatpush.bf16.msra.mxu0 %v572
    %585 = vmatpush.bf16.msra.mxu0 %v571
    %586 = vmatmul.bf16.gmra.mxu0 %v576
    %v587 = vpop.f32.mrf.mxu0
    %v588 = vadd.f32 0.0, %v587
    %v589 = vpop.f32.mrf.mxu0
    %v590 = vadd.f32 0.0, %v589
    %591 = vdwg.mxu0
    %v592 = vpack.c.bf16 %v520, %v520
    %v593 = vpack.c.bf16 %v522, %v522
    %v594 = vpack.c.bf16 %v554, %v554
    %v595 = vpack.c.bf16 %v556, %v556
    %v596 = vpack.c.bf16 %v588, %v588
    %v597 = vpack.c.bf16 %v590, %v590
    %v598 = vpack.c.bf16 %v472, %v472
    %v599 = vpack.c.bf16 %v473, %v473
    %v600 = vpack.c.bf16 %v474, %v474
    %v601 = vpack.c.bf16 %v475, %v475
    %v602 = vpack.c.bf16 %v476, %v476
    %v603 = vpack.c.bf16 %v477, %v477
    %v605 = vsel %vm411, %v598, 0
    %vm607 = vcmask 1043456
    %v609 = vsel %vm607, %v592, 0
    %611 = vmatpush.bf16.msra.mxu0 0
    %612 = vmatpush.bf16.msra.mxu0 0
    %613 = vmatpush.bf16.msra.mxu0 0
    %614 = vmatpush.bf16.msra.mxu0 0
    %615 = vmatpush.bf16.msra.mxu0 0
    %616 = vmatpush.bf16.msra.mxu0 0
    %617 = vmatpush.bf16.msra.mxu0 0
    %618 = vmatpush.bf16.msra.mxu0 %v609
    %619 = vmatmul.bf16.gmra.mxu0 %v605
    %v620 = vpop.f32.mrf.mxu0
    %v621 = vadd.f32 0.0, %v620
    %v622 = vpop.f32.mrf.mxu0
    %623 = vdwg.mxu0
    %v625 = vsel %vm411, %v599, 0
    %v628 = vsel %vm607, %v593, 0
    %630 = vmatpush.bf16.msra.mxu0 0
    %631 = vmatpush.bf16.msra.mxu0 0
    %632 = vmatpush.bf16.msra.mxu0 0
    %633 = vmatpush.bf16.msra.mxu0 0
    %634 = vmatpush.bf16.msra.mxu0 0
    %635 = vmatpush.bf16.msra.mxu0 0
    %636 = vmatpush.bf16.msra.mxu0 0
    %637 = vmatpush.bf16.msra.mxu0 %v628
    %638 = vmatmul.bf16.gmra.mxu0 %v625
    %v639 = vpop.f32.mrf.mxu0
    %v640 = vadd.f32 0.0, %v639
    %v641 = vpop.f32.mrf.mxu0
    %642 = vdwg.mxu0
    %v644 = vsel %vm411, %v600, 0
    %v647 = vsel %vm607, %v594, 0
    %649 = vmatpush.bf16.msra.mxu0 0
    %650 = vmatpush.bf16.msra.mxu0 0
    %651 = vmatpush.bf16.msra.mxu0 0
    %652 = vmatpush.bf16.msra.mxu0 0
    %653 = vmatpush.bf16.msra.mxu0 0
    %654 = vmatpush.bf16.msra.mxu0 0
    %655 = vmatpush.bf16.msra.mxu0 0
    %656 = vmatpush.bf16.msra.mxu0 %v647
    %657 = vmatmul.bf16.gmra.mxu0 %v644
    %v658 = vpop.f32.mrf.mxu0
    %v659 = vadd.f32 0.0, %v658
    %v660 = vpop.f32.mrf.mxu0
    %661 = vdwg.mxu0
    %v663 = vsel %vm411, %v601, 0
    %v666 = vsel %vm607, %v595, 0
    %668 = vmatpush.bf16.msra.mxu0 0
    %669 = vmatpush.bf16.msra.mxu0 0
    %670 = vmatpush.bf16.msra.mxu0 0
    %671 = vmatpush.bf16.msra.mxu0 0
    %672 = vmatpush.bf16.msra.mxu0 0
    %673 = vmatpush.bf16.msra.mxu0 0
    %674 = vmatpush.bf16.msra.mxu0 0
    %675 = vmatpush.bf16.msra.mxu0 %v666
    %676 = vmatmul.bf16.gmra.mxu0 %v663
    %v677 = vpop.f32.mrf.mxu0
    %v678 = vadd.f32 0.0, %v677
    %v679 = vpop.f32.mrf.mxu0
    %680 = vdwg.mxu0
    %v682 = vsel %vm411, %v602, 0
    %v685 = vsel %vm607, %v596, 0
    %687 = vmatpush.bf16.msra.mxu0 0
    %688 = vmatpush.bf16.msra.mxu0 0
    %689 = vmatpush.bf16.msra.mxu0 0
    %690 = vmatpush.bf16.msra.mxu0 0
    %691 = vmatpush.bf16.msra.mxu0 0
    %692 = vmatpush.bf16.msra.mxu0 0
    %693 = vmatpush.bf16.msra.mxu0 0
    %694 = vmatpush.bf16.msra.mxu0 %v685
    %695 = vmatmul.bf16.gmra.mxu0 %v682
    %v696 = vpop.f32.mrf.mxu0
    %v697 = vadd.f32 0.0, %v696
    %v698 = vpop.f32.mrf.mxu0
    %699 = vdwg.mxu0
    %v701 = vsel %vm411, %v603, 0
    %v704 = vsel %vm607, %v597, 0
    %706 = vmatpush.bf16.msra.mxu0 0
    %707 = vmatpush.bf16.msra.mxu0 0
    %708 = vmatpush.bf16.msra.mxu0 0
    %709 = vmatpush.bf16.msra.mxu0 0
    %710 = vmatpush.bf16.msra.mxu0 0
    %711 = vmatpush.bf16.msra.mxu0 0
    %712 = vmatpush.bf16.msra.mxu0 0
    %713 = vmatpush.bf16.msra.mxu0 %v704
    %714 = vmatmul.bf16.gmra.mxu0 %v701
    %v715 = vpop.f32.mrf.mxu0
    %v716 = vadd.f32 0.0, %v715
    %v717 = vpop.f32.mrf.mxu0
    %718 = vdwg.mxu0
    %v719 = vadd.f32 %v621, %v659
    %v720 = vadd.f32 %v640, %v678
    %v721 = vadd.f32 %v719, %v697
    %v722 = vadd.f32 %v720, %v716
    %v723 = vld [vmem:[%s5] sm:$0xf]
    %v724 = vld [vmem:[%s5 + $0x4] sm:$0xf]
    %v725 = vld [vmem:[%s5 + $0x8] sm:$0xf]
    %v726 = vld [vmem:[%s5 + $0xc] sm:$0xf]
    %v729 = vunpack.c.l.b16 %v307
    %v730 = vunpack.c.l.b16 %v308
    %v731 = vpack.c.b16 %v730, %v729
    %v736 = vunpack.c.l.b16 %v723
    %v737 = vunpack.c.l.b16 %v724
    %v738 = vunpack.c.l.b16 %v725
    %v739 = vunpack.c.l.b16 %v726
    %v740 = vpack.c.b16 %v737, %v736
    %v741 = vpack.c.b16 %v739, %v738
    %v745 = vsel %vm196, %v731, 0
    %747 = vmatpush.bf16.msra.mxu0 0
    %748 = vmatpush.bf16.msra.mxu0 0
    %749 = vmatpush.bf16.msra.mxu0 0
    %750 = vmatpush.bf16.msra.mxu0 0
    %751 = vmatpush.bf16.msra.mxu0 0
    %752 = vmatpush.bf16.msra.mxu0 0
    %753 = vmatpush.bf16.msra.mxu0 %v741
    %754 = vmatpush.bf16.msra.mxu0 %v740
    %755 = vmatmul.bf16.gmra.mxu0 %v745
    %v756 = vpop.f32.mrf.mxu0
    %v757 = vadd.f32 0.0, %v756
    %v758 = vpop.f32.mrf.mxu0
    %v759 = vadd.f32 0.0, %v758
    %760 = vdwg.mxu0
    %v761 = vadd.f32 %v721, %v757
    %v762 = vadd.f32 %v722, %v759
    %v763 = vadd.f32 %v761, %v305
    %v764 = vadd.f32 %v762, %v306
    %v765 = vld [vmem:[%s7] sm:$0x1]
    %v767 = vperm.slane %v765, 0
    %v769 = vadd.f32 %v763, %v767
    %v770 = vadd.f32 %v764, %v767
    %v771 = vtanh.pop %v769
    %v772 = vtanh.pop %v770
    %v773 = vpack.c.bf16 %v772, %v771
    %v774 = vld [vmem:[%s8] sm:$0xf]
    %v775 = vld [vmem:[%s8 + $0x4] sm:$0xf]
    %v776 = vld [vmem:[%s8 + $0x8] sm:$0xf]
    %v777 = vld [vmem:[%s8 + $0xc] sm:$0xf]
    %v778 = vld [vmem:[%s9] sm:$0x1]
    %v780 = vperm.slane %v778, 0
    %v786 = vunpack.c.l.b16 %v774
    %v787 = vunpack.c.l.b16 %v775
    %v788 = vunpack.c.l.b16 %v776
    %v789 = vunpack.c.l.b16 %v777
    %v790 = vpack.c.b16 %v787, %v786
    %v791 = vpack.c.b16 %v789, %v788
    %v795 = vsel %vm196, %v773, 0
    %797 = vmatpush.bf16.msra.mxu0 0
    %798 = vmatpush.bf16.msra.mxu0 0
    %799 = vmatpush.bf16.msra.mxu0 0
    %800 = vmatpush.bf16.msra.mxu0 0
    %801 = vmatpush.bf16.msra.mxu0 0
    %802 = vmatpush.bf16.msra.mxu0 0
    %803 = vmatpush.bf16.msra.mxu0 %v791
    %804 = vmatpush.bf16.msra.mxu0 %v790
    %805 = vmatmul.bf16.gmra.mxu0 %v795
    %v806 = vpop.f32.mrf.mxu0
    %v807 = vadd.f32 %v780, %v806
    %v808 = vpop.f32.mrf.mxu0
    %v809 = vadd.f32 %v780, %v808
    %810 = vdwg.mxu0
    %811 = vmax.xlane.f32.xlu0 %v807
    %v812 = vpop.xlane.xlu0 %811
    %813 = vmax.xlane.f32.xlu0 %v809
    %v814 = vpop.xlane.xlu0 %813
    %v815 = vsub.f32 %v807, %v812
    %v816 = vsub.f32 %v809, %v814
    %v817 = vmul.f32 %v815, 1.442695
    %v818 = vpow.pop %v817
    %v819 = vmul.f32 %v816, 1.442695
    %v820 = vpow.pop %v819
    %821 = vadd.xlane.f32.xlu0 %v818
    %v822 = vpop.xlane.xlu0 %821
    %823 = vadd.xlane.f32.xlu0 %v820
    %v824 = vpop.xlane.xlu0 %823
    %v825 = vlog2.pop %v822
    %v826 = vmul.f32 %v825, 0.6931472
    %v827 = vlog2.pop %v824
    %v828 = vmul.f32 %v827, 0.6931472
    %v829 = vadd.f32 %v812, %v826
    %v830 = vadd.f32 %v814, %v828
    %v831 = vsub.f32 %v807, %v829
    %v832 = vsub.f32 %v809, %v830
    %833 = vst [vmem:[#allocation2] sm:$0xff] %v831
    %834 = vst [vmem:[#allocation2 + $0x8] sm:$0xff] %v832
    // Predicated region
    $region42: #{tpu_custom_call.1} parent=1 // pred_check
      _
    $region43: #{tpu_custom_call.1} parent=1 // pred_check_branch
      %836 = sbr.rel (0) target = $region45
    $region44: #{tpu_custom_call.1} parent=1 // pred_region
      %838 = vsyncadd [#allocation3], 0
      %s839 = sshll.u32 [#allocation2], 4
      %s840 = int_to_ptr.vmem [resolvable:$true] %s839
      %s841 = sshll.u32 %s10, 4
      %s842 = int_to_ptr.hbm [resolvable:$true] %s841
      %847 = dma.vmem_to_hbm [thread:$0]  %s840, 256, %s842, [#allocation3], 128, 128, 8
    $region45: #{tpu_custom_call.1} parent=1 // pred_fallthru
      _
    // Predicated region
    $region46: #{tpu_custom_call.1} parent=1 // pred_check
      _
    $region47: #{tpu_custom_call.1} parent=1 // pred_check_branch
      %849 = sbr.rel (0) target = $region49
    $region48: #{tpu_custom_call.1} parent=1 // pred_region
      %851 = dma.done [#allocation3], 256
    $region49: #{tpu_custom_call.1} parent=1 // pred_fallthru
      _
    %852 = vsyncpa [#allocation3], 1

</llo_original>
